<compile_context>
chip_gen: v7x
topology: tpu7x:2x2x1
jax: 0.10.0
libtpu: 0.0.40
codegen_flags: <defaults>
</compile_context>

<pallas_src>
import jax
import jax.numpy as jnp
from jax.experimental import pallas as pl
from jax.experimental.pallas import tpu as pltpu

D_IN = 28 * 28          # 784
D_HID = 256
D_OUT = 10
D_OUT_PAD = 128         # lane-dense output width (unmasked stores)


def _cdiv(a, b):
    return (a + b - 1) // b


def _round_up(n, m):
    return _cdiv(n, m) * m


def mlp_kernel(x_ref, w1_ref, b1_ref, w2_ref, b2_ref, o_ref, h_ref):
    # x_ref:  (TB, 784)  f32   w1_ref: (784, 256) bf16   b1_ref: (1, 256) f32
    # w2_ref: (256, 128) bf16  b2_ref: (1, 128)  f32
    # o_ref:  (TB, 128)  bf16  h_ref:  (TB, 256) bf16 scratch
    x = x_ref[...].astype(jnp.bfloat16)                       # cast in-kernel (VPU)
    h = jnp.dot(x, w1_ref[...], preferred_element_type=jnp.float32)
    h = jnp.maximum(h + b1_ref[...], 0.0)                     # bias + ReLU in f32
    h_ref[...] = h.astype(jnp.bfloat16)                       # bf16 scratch
    # TODO(synk): nn.Dropout(p=0.25) is identity in eval mode; training-mode
    # stochastic dropout (pltpu.prng_seed / prng_random_bits) not emitted here.
    y = jnp.dot(h_ref[...], w2_ref[...], preferred_element_type=jnp.float32)
    o_ref[...] = (y + b2_ref[...]).astype(o_ref.dtype)


def mlp_forward(x_nchw, w1, b1, w2, b2, *, block_b=1024):
    """x_nchw: (B, 1, 28, 28) float32 -> logits (B, 10) float32.

    w1: (784, 256), b1: (256,), w2: (256, 10), b2: (10,)  (Linear weights stored
    transposed vs PyTorch, i.e. (in, out), so y = x @ W + b).
    """
    B = x_nchw.shape[0]
    x = x_nchw.reshape(B, D_IN).astype(jnp.float32)   # same as torch .view(-1, 784)

    # Batch tile: multiple of 16 (bf16 sublane packing), <= block_b, chosen to
    # minimize B_pad waste (e.g. B=300 -> TB=160, not 512).
    n_tiles = max(1, _cdiv(B, block_b))
    TB = _round_up(_cdiv(B, n_tiles), 16)
    # v7x: a single grid step can't shard the "parallel" axis over both TensorCores;
    # split into >=2 tiles whenever the batch is large enough to split.
    if B > 16 and _cdiv(B, TB) < 2:
        TB = _round_up(_cdiv(B, 2), 16)
    B_pad = _round_up(B, TB)
    grid = (B_pad // TB,)

    # Only pad batch rows when needed (no K padding, no wrapper-side cast of x).
    if B_pad != B:
        x = jnp.pad(x, ((0, B_pad - B), (0, 0)))

    # Small operands: cast/pad once (zeros contribute nothing to the dots).
    w1_c = w1.astype(jnp.bfloat16)                                       # (784, 256)
    w2_p = jnp.zeros((D_HID, D_OUT_PAD), jnp.bfloat16).at[:, :D_OUT].set(
        w2.astype(jnp.bfloat16))
    b1_p = b1.reshape(1, D_HID).astype(jnp.float32)
    b2_p = jnp.zeros((1, D_OUT_PAD), jnp.float32).at[0, :D_OUT].set(
        b2.astype(jnp.float32))

    cost = pl.CostEstimate(
        flops=2 * B_pad * (D_IN * D_HID + D_HID * D_OUT_PAD),
        transcendentals=0,
        bytes_accessed=(x.size * 4 + w1_c.size * 2 + w2_p.size * 2
                        + b1_p.size * 4 + b2_p.size * 4
                        + B_pad * D_OUT_PAD * 2),
    )

    out = pl.pallas_call(
        mlp_kernel,
        out_shape=jax.ShapeDtypeStruct((B_pad, D_OUT_PAD), jnp.bfloat16),
        grid_spec=pltpu.PrefetchScalarGridSpec(
            num_scalar_prefetch=0,
            grid=grid,
            in_specs=[
                # streamed per batch tile; 784 == full last dim, so (8,128) rule holds
                pl.BlockSpec((TB, D_IN), lambda i: (i, 0)),
                # VMEM-resident weights/biases (same block index every grid step)
                pl.BlockSpec((D_IN, D_HID), lambda i: (0, 0)),
                pl.BlockSpec((1, D_HID), lambda i: (0, 0)),
                pl.BlockSpec((D_HID, D_OUT_PAD), lambda i: (0, 0)),
                pl.BlockSpec((1, D_OUT_PAD), lambda i: (0, 0)),
            ],
            out_specs=pl.BlockSpec((TB, D_OUT_PAD), lambda i: (i, 0)),
            scratch_shapes=[pltpu.VMEM((TB, D_HID), jnp.bfloat16)],
        ),
        compiler_params=pltpu.CompilerParams(
            dimension_semantics=("parallel",),      # batch axis: megacore sharding
            vmem_limit_bytes=32 * 1024 * 1024,      # safe for TB<=2048 on v5e/v6e/v7x
        ),
        cost_estimate=cost,
    )(x, w1_c, b1_p, w2_p, b2_p)

    return out[:B, :D_OUT].astype(jnp.float32)


def init_params(key):
    """Deterministic params matching nn.Linear shapes (stored transposed)."""
    k1, k2, k3, k4 = jax.random.split(key, 4)
    # PyTorch nn.Linear default init: U(-1/sqrt(fan_in), 1/sqrt(fan_in))
    lim1 = 1.0 / jnp.sqrt(jnp.float32(D_IN))
    lim2 = 1.0 / jnp.sqrt(jnp.float32(D_HID))
    w1 = jax.random.uniform(k1, (D_IN, D_HID), jnp.float32, -lim1, lim1)
    b1 = jax.random.uniform(k2, (D_HID,), jnp.float32, -lim1, lim1)
    w2 = jax.random.uniform(k3, (D_HID, D_OUT), jnp.float32, -lim2, lim2)
    b2 = jax.random.uniform(k4, (D_OUT,), jnp.float32, -lim2, lim2)
    return w1, b1, w2, b2


if __name__ == "__main__":
    key = jax.random.PRNGKey(0)
    kx, kp = jax.random.split(key)

    w1, b1, w2, b2 = init_params(kp)

    # B=8: single-tile path; B=40: exercises row padding + 2-step ("parallel") grid.
    for B in (8, 40):
        x = jax.random.normal(jax.random.fold_in(kx, B), (B, 1, 28, 28), jnp.float32)
        out = jax.block_until_ready(mlp_forward(x, w1, b1, w2, b2))

        # Pure-JAX f32 reference (eval mode: dropout = identity).
        ref = jnp.maximum(x.reshape(B, D_IN) @ w1 + b1, 0.0) @ w2 + b2
        assert out.shape == (B, D_OUT)
        # bf16 matmul operands / bf16 writeback with f32 accumulation -> small
        # deviation vs the f32 reference.
        assert jnp.allclose(out, ref, atol=5e-2, rtol=5e-2), f"mismatch (B={B})"

    print("KERNEL_OK")
</pallas_src>

<mosaic_0001>
module attributes {stable_mosaic.version = 11 : i64} {
  func.func @mlp_kernel(%arg0: i32, %arg1: memref<16x784xf32, #tpu.memory_space<vmem>>, %arg2: memref<784x256xbf16, #tpu.memory_space<vmem>>, %arg3: memref<1x256xf32, #tpu.memory_space<vmem>>, %arg4: memref<256x128xbf16, #tpu.memory_space<vmem>>, %arg5: memref<1x128xf32, #tpu.memory_space<vmem>>, %arg6: memref<16x128xbf16, #tpu.memory_space<vmem>>, %arg7: memref<16x256xbf16, #tpu.memory_space<vmem>>) attributes {dimension_semantics = [#tpu.dimension_semantics<parallel>], iteration_bounds = array<i64: 1>, scalar_prefetch = 0 : i64, scratch_operands = 1 : i64, tpu.core_type = #tpu.core_type<tc>, window_params = [{transform_indices = @transform_0, window_bounds = array<i64: 16, 784>}, {pipeline_mode = #tpu.pipeline_mode<synchronous>, transform_indices = @transform_1, window_bounds = array<i64: 784, 256>}, {pipeline_mode = #tpu.pipeline_mode<synchronous>, transform_indices = @transform_2, window_bounds = array<i64: 1, 256>}, {pipeline_mode = #tpu.pipeline_mode<synchronous>, transform_indices = @transform_3, window_bounds = array<i64: 256, 128>}, {pipeline_mode = #tpu.pipeline_mode<synchronous>, transform_indices = @transform_4, window_bounds = array<i64: 1, 128>}, {transform_indices = @transform_5, window_bounds = array<i64: 16, 128>}]} {
    %c0 = arith.constant 0 : index
    %c0_0 = arith.constant 0 : index
    %0 = vector.load %arg1[%c0, %c0_0] : memref<16x784xf32, #tpu.memory_space<vmem>>, vector<16x784xf32>
    %1 = arith.truncf %0 : vector<16x784xf32> to vector<16x784xbf16>
    %c0_1 = arith.constant 0 : index
    %c0_2 = arith.constant 0 : index
    %2 = vector.load %arg2[%c0_1, %c0_2] : memref<784x256xbf16, #tpu.memory_space<vmem>>, vector<784x256xbf16>
    %cst = arith.constant dense<0.000000e+00> : vector<16x256xf32>
    %3 = tpu.matmul %1, %2, %cst {dimension_numbers = #tpu.dot_dimension_numbers<[1], [0], [0], [1], [0, 0, 1, 1], [], []>} : vector<16x784xbf16>, vector<784x256xbf16>, vector<16x256xf32> -> vector<16x256xf32>
    %c0_3 = arith.constant 0 : index
    %c0_4 = arith.constant 0 : index
    %4 = vector.load %arg3[%c0_3, %c0_4] : memref<1x256xf32, #tpu.memory_space<vmem>>, vector<1x256xf32>
    %5 = vector.broadcast %4 : vector<1x256xf32> to vector<16x256xf32>
    %6 = arith.addf %3, %5 : vector<16x256xf32>
    %cst_5 = arith.constant 0.000000e+00 : f32
    %7 = vector.broadcast %cst_5 : f32 to vector<16x256xf32>
    %8 = arith.maximumf %6, %7 : vector<16x256xf32>
    %9 = arith.truncf %8 : vector<16x256xf32> to vector<16x256xbf16>
    %c0_6 = arith.constant 0 : index
    %c0_7 = arith.constant 0 : index
    %10 = vector.load %arg7[%c0_6, %c0_7] : memref<16x256xbf16, #tpu.memory_space<vmem>>, vector<16x256xbf16>
    tpu.vector_store %arg7[%c0_6, %c0_7], %9 {strides = array<i32>} : memref<16x256xbf16, #tpu.memory_space<vmem>>, vector<16x256xbf16>,
    %c0_8 = arith.constant 0 : index
    %c0_9 = arith.constant 0 : index
    %11 = vector.load %arg7[%c0_8, %c0_9] : memref<16x256xbf16, #tpu.memory_space<vmem>>, vector<16x256xbf16>
    %c0_10 = arith.constant 0 : index
    %c0_11 = arith.constant 0 : index
    %12 = vector.load %arg4[%c0_10, %c0_11] : memref<256x128xbf16, #tpu.memory_space<vmem>>, vector<256x128xbf16>
    %cst_12 = arith.constant dense<0.000000e+00> : vector<16x128xf32>
    %13 = tpu.matmul %11, %12, %cst_12 {dimension_numbers = #tpu.dot_dimension_numbers<[1], [0], [0], [1], [0, 0, 1, 1], [], []>} : vector<16x256xbf16>, vector<256x128xbf16>, vector<16x128xf32> -> vector<16x128xf32>
    %c0_13 = arith.constant 0 : index
    %c0_14 = arith.constant 0 : index
    %14 = vector.load %arg5[%c0_13, %c0_14] : memref<1x128xf32, #tpu.memory_space<vmem>>, vector<1x128xf32>
    %15 = vector.broadcast %14 : vector<1x128xf32> to vector<16x128xf32>
    %16 = arith.addf %13, %15 : vector<16x128xf32>
    %17 = arith.truncf %16 : vector<16x128xf32> to vector<16x128xbf16>
    %c0_15 = arith.constant 0 : index
    %c0_16 = arith.constant 0 : index
    %18 = vector.load %arg6[%c0_15, %c0_16] : memref<16x128xbf16, #tpu.memory_space<vmem>>, vector<16x128xbf16>
    tpu.vector_store %arg6[%c0_15, %c0_16], %17 {strides = array<i32>} : memref<16x128xbf16, #tpu.memory_space<vmem>>, vector<16x128xbf16>,
    return
  }
  func.func @transform_0(%arg0: i32) -> (i32, i32) {
    %c0_i32 = arith.constant 0 : i32
    %c0_i32_0 = arith.constant 0 : i32
    return %arg0, %c0_i32 : i32, i32
  }
  func.func @transform_1(%arg0: i32) -> (i32, i32) {
    %c0_i32 = arith.constant 0 : i32
    %c0_i32_0 = arith.constant 0 : i32
    %c0_i32_1 = arith.constant 0 : i32
    return %c0_i32, %c0_i32_0 : i32, i32
  }
  func.func @transform_2(%arg0: i32) -> (i32, i32) {
    %c0_i32 = arith.constant 0 : i32
    %c0_i32_0 = arith.constant 0 : i32
    %c0_i32_1 = arith.constant 0 : i32
    return %c0_i32, %c0_i32_0 : i32, i32
  }
  func.func @transform_3(%arg0: i32) -> (i32, i32) {
    %c0_i32 = arith.constant 0 : i32
    %c0_i32_0 = arith.constant 0 : i32
    %c0_i32_1 = arith.constant 0 : i32
    return %c0_i32, %c0_i32_0 : i32, i32
  }
  func.func @transform_4(%arg0: i32) -> (i32, i32) {
    %c0_i32 = arith.constant 0 : i32
    %c0_i32_0 = arith.constant 0 : i32
    %c0_i32_1 = arith.constant 0 : i32
    return %c0_i32, %c0_i32_0 : i32, i32
  }
  func.func @transform_5(%arg0: i32) -> (i32, i32) {
    %c0_i32 = arith.constant 0 : i32
    %c0_i32_0 = arith.constant 0 : i32
    return %arg0, %c0_i32 : i32, i32
  }
}

</mosaic_0001>

<llo_original>
// kernel: tpu_custom_call.1
$region0: #{tpu_custom_call.1}
  #allocation0 [shape = 'u32[]', space=smem, size = 0x4, offset = 0x4, fixed_abs, tag = 'smem constant byte address 0x4 - core index']
  #allocation1 [shape = 'u32[144,128]{1,0:T(1,128)}', space=vmem, size = 0x12000, scoped, tag = 'internal scratch']
  #allocation2 [shape = 'bf16[16,256]{1,0:T(16,128)(2,1)}', space=vmem, size = 0x2000, scoped, tag = 'scratch operand']
  %s0 = inlined_call_operand.hbm [shape: f32[16,784], index: 0, kind: input, shape index: {}]
  %s1 = inlined_call_operand.hbm [shape: bf16[784,256], index: 1, kind: input, shape index: {}]
  %s2 = inlined_call_operand.vmem [shape: f32[1,256], index: 2, kind: input, shape index: {}]
  %s3 = inlined_call_operand.hbm [shape: bf16[256,128], index: 3, kind: input, shape index: {}]
  %s4 = inlined_call_operand.vmem [shape: f32[1,128], index: 4, kind: input, shape index: {}]
  %s5 = inlined_call_operand.hbm [shape: bf16[16,128], index: 5, kind: output, shape index: {}]
  %s6 = sld [smem:[#allocation0]]
  $region42: #{tpu_custom_call.1} parent=0
    _
  %s8 = ssub.s32 1, %s6
  %s9 = scalar_select 0, %s8, %s6
  $region1: #{tpu_custom_call.1} parent=0
    #allocation3 [shape = 'u8[57344]{0}', space=vmem, size = 0xe000, scoped, tag = 'input window, operand 0, single buffered']
    #allocation4 [shape = 's32[1]{0}', space=sflag, size = 0x4, scoped, tag = 'scoped memory for tpu_custom_call.1']
    #allocation5 [shape = 's32[1]{0}', space=sflag, size = 0x4, scoped, tag = 'scoped memory for tpu_custom_call.1']
    #allocation6 [shape = 'u8[401408]{0}', space=vmem, size = 0x62000, scoped, tag = 'input window, operand 1, single buffered']
    #allocation7 [shape = 's32[1]{0}', space=sflag, size = 0x4, scoped, tag = 'scoped memory for tpu_custom_call.1']
    #allocation8 [shape = 'u8[65536]{0}', space=vmem, size = 0x10000, scoped, tag = 'input window, operand 3, single buffered']
    #allocation9 [shape = 'u8[4096]{0}', space=vmem, size = 0x1000, scoped, tag = 'output window, operand 0, single buffered']
    %10 = vsyncpa [#allocation4], 0
    %11 = vsyncpa [#allocation7], 0
    %12 = vsyncpa [#allocation5], 0
    // Predicated region
    $region2: #{tpu_custom_call.1} parent=1 // pred_check
      _
    $region3: #{tpu_custom_call.1} parent=1 // pred_check_branch
      %14 = sbr.rel (0) target = $region5
    $region4: #{tpu_custom_call.1} parent=1 // pred_region
      %s16 = ssub.s32 1792, 1792
      %17 = vsyncadd [#allocation4], %s16
      %s18 = sshll.u32 [#allocation3], 4
      %s19 = int_to_ptr.vmem [resolvable:$true] %s18
      %24 = dma.hbm_to_vmem [thread:$0]  %s0, 1792, %s19, [#allocation4], 896, 896, 56
    $region5: #{tpu_custom_call.1} parent=1 // pred_fallthru
      _
    // Predicated region
    $region6: #{tpu_custom_call.1} parent=1 // pred_check
      _
    $region7: #{tpu_custom_call.1} parent=1 // pred_check_branch
      %26 = sbr.rel (0) target = $region9
    $region8: #{tpu_custom_call.1} parent=1 // pred_region
      %s28 = ssub.s32 12544, 12544
      %29 = vsyncadd [#allocation7], %s28
      %s30 = sshll.u32 [#allocation6], 4
      %s31 = int_to_ptr.vmem [resolvable:$true] %s30
      %36 = dma.hbm_to_vmem [thread:$0]  %s1, 12544, %s31, [#allocation7], 128, 128, 8
    $region9: #{tpu_custom_call.1} parent=1 // pred_fallthru
      _
    // Predicated region
    $region10: #{tpu_custom_call.1} parent=1 // pred_check
      _
    $region11: #{tpu_custom_call.1} parent=1 // pred_check_branch
      %38 = sbr.rel (0) target = $region13
    $region12: #{tpu_custom_call.1} parent=1 // pred_region
      _
    $region13: #{tpu_custom_call.1} parent=1 // pred_fallthru
      _
    // Predicated region
    $region14: #{tpu_custom_call.1} parent=1 // pred_check
      _
    $region15: #{tpu_custom_call.1} parent=1 // pred_check_branch
      %40 = sbr.rel (0) target = $region17
    $region16: #{tpu_custom_call.1} parent=1 // pred_region
      %s42 = ssub.s32 2048, 2048
      %43 = vsyncadd [#allocation7], %s42
      %s44 = sshll.u32 [#allocation8], 4
      %s45 = int_to_ptr.vmem [resolvable:$true] %s44
      %50 = dma.hbm_to_vmem [thread:$0]  %s3, 2048, %s45, [#allocation7], 64, 64, 4
    $region17: #{tpu_custom_call.1} parent=1 // pred_fallthru
      _
    // Predicated region
    $region18: #{tpu_custom_call.1} parent=1 // pred_check
      _
    $region19: #{tpu_custom_call.1} parent=1 // pred_check_branch
      %52 = sbr.rel (0) target = $region21
    $region20: #{tpu_custom_call.1} parent=1 // pred_region
      _
    $region21: #{tpu_custom_call.1} parent=1 // pred_fallthru
      _
    // Predicated region
    $region22: #{tpu_custom_call.1} parent=1 // pred_check
      _
    $region23: #{tpu_custom_call.1} parent=1 // pred_check_branch
      %54 = sbr.rel (0) target = $region25
    $region24: #{tpu_custom_call.1} parent=1 // pred_region
      %55 = dma.done [#allocation4], 1792
    $region25: #{tpu_custom_call.1} parent=1 // pred_fallthru
      _
    // Predicated region
    $region26: #{tpu_custom_call.1} parent=1 // pred_check
      _
    $region27: #{tpu_custom_call.1} parent=1 // pred_check_branch
      %57 = sbr.rel (0) target = $region29
    $region28: #{tpu_custom_call.1} parent=1 // pred_region
      %58 = dma.done [#allocation7], 12544
    $region29: #{tpu_custom_call.1} parent=1 // pred_fallthru
      _
    // Predicated region
    $region30: #{tpu_custom_call.1} parent=1 // pred_check
      _
    $region31: #{tpu_custom_call.1} parent=1 // pred_check_branch
      %60 = sbr.rel (0) target = $region33
    $region32: #{tpu_custom_call.1} parent=1 // pred_region
      %61 = dma.done [#allocation7], 2048
    $region33: #{tpu_custom_call.1} parent=1 // pred_fallthru
      _
    %v63 = vld [vmem:[#allocation3] sm:$0xff]
    %v64 = vld [vmem:[#allocation3 + $0x8] sm:$0xff]
    %v65 = vld [vmem:[#allocation3 + $0x10] sm:$0xff]
    %v66 = vld [vmem:[#allocation3 + $0x18] sm:$0xff]
    %v67 = vld [vmem:[#allocation3 + $0x20] sm:$0xff]
    %v68 = vld [vmem:[#allocation3 + $0x28] sm:$0xff]
    %v69 = vld [vmem:[#allocation3 + $0x30] sm:$0xff]
    %v70 = vld [vmem:[#allocation3 + $0x38] sm:$0xff]
    %v71 = vld [vmem:[#allocation3 + $0x40] sm:$0xff]
    %v72 = vld [vmem:[#allocation3 + $0x48] sm:$0xff]
    %v73 = vld [vmem:[#allocation3 + $0x50] sm:$0xff]
    %v74 = vld [vmem:[#allocation3 + $0x58] sm:$0xff]
    %v75 = vld [vmem:[#allocation3 + $0x60] sm:$0xff]
    %v76 = vld [vmem:[#allocation3 + $0x68] sm:$0xff]
    %v77 = vpack.c.bf16 %v70, %v63
    %v78 = vpack.c.bf16 %v71, %v64
    %v79 = vpack.c.bf16 %v72, %v65
    %v80 = vpack.c.bf16 %v73, %v66
    %v81 = vpack.c.bf16 %v74, %v67
    %v82 = vpack.c.bf16 %v75, %v68
    %v83 = vpack.c.bf16 %v76, %v69
    %v84 = vld [vmem:[#allocation6] sm:$0xff]
    %v85 = vld [vmem:[#allocation6 + $0x8] sm:$0xff]
    %v86 = vld [vmem:[#allocation6 + $0x10] sm:$0xff]
    %v87 = vld [vmem:[#allocation6 + $0x18] sm:$0xff]
    %v88 = vld [vmem:[#allocation6 + $0x20] sm:$0xff]
    %v89 = vld [vmem:[#allocation6 + $0x28] sm:$0xff]
    %v90 = vld [vmem:[#allocation6 + $0x30] sm:$0xff]
    %v91 = vld [vmem:[#allocation6 + $0x38] sm:$0xff]
    %v92 = vld [vmem:[#allocation6 + $0x40] sm:$0xff]
    %v93 = vld [vmem:[#allocation6 + $0x48] sm:$0xff]
    %v94 = vld [vmem:[#allocation6 + $0x50] sm:$0xff]
    %v95 = vld [vmem:[#allocation6 + $0x58] sm:$0xff]
    %v96 = vld [vmem:[#allocation6 + $0x60] sm:$0xff]
    %v97 = vld [vmem:[#allocation6 + $0x68] sm:$0xff]
    %v98 = vld [vmem:[#allocation6 + $0x70] sm:$0xff]
    %v99 = vld [vmem:[#allocation6 + $0x78] sm:$0xff]
    %v100 = vld [vmem:[#allocation6 + $0x80] sm:$0xff]
    %v101 = vld [vmem:[#allocation6 + $0x88] sm:$0xff]
    %v102 = vld [vmem:[#allocation6 + $0x90] sm:$0xff]
    %v103 = vld [vmem:[#allocation6 + $0x98] sm:$0xff]
    %v104 = vld [vmem:[#allocation6 + $0xa0] sm:$0xff]
    %v105 = vld [vmem:[#allocation6 + $0xa8] sm:$0xff]
    %v106 = vld [vmem:[#allocation6 + $0xb0] sm:$0xff]
    %v107 = vld [vmem:[#allocation6 + $0xb8] sm:$0xff]
    %v108 = vld [vmem:[#allocation6 + $0xc0] sm:$0xff]
    %v109 = vld [vmem:[#allocation6 + $0xc8] sm:$0xff]
    %v110 = vld [vmem:[#allocation6 + $0xd0] sm:$0xff]
    %v111 = vld [vmem:[#allocation6 + $0xd8] sm:$0xff]
    %v112 = vld [vmem:[#allocation6 + $0xe0] sm:$0xff]
    %v113 = vld [vmem:[#allocation6 + $0xe8] sm:$0xff]
    %v114 = vld [vmem:[#allocation6 + $0xf0] sm:$0xff]
    %v115 = vld [vmem:[#allocation6 + $0xf8] sm:$0xff]
    %v116 = vld [vmem:[#allocation6 + $0x100] sm:$0xff]
    %v117 = vld [vmem:[#allocation6 + $0x108] sm:$0xff]
    %v118 = vld [vmem:[#allocation6 + $0x110] sm:$0xff]
    %v119 = vld [vmem:[#allocation6 + $0x118] sm:$0xff]
    %v120 = vld [vmem:[#allocation6 + $0x120] sm:$0xff]
    %v121 = vld [vmem:[#allocation6 + $0x128] sm:$0xff]
    %v122 = vld [vmem:[#allocation6 + $0x130] sm:$0xff]
    %v123 = vld [vmem:[#allocation6 + $0x138] sm:$0xff]
    %v124 = vld [vmem:[#allocation6 + $0x140] sm:$0xff]
    %v125 = vld [vmem:[#allocation6 + $0x148] sm:$0xff]
    %v126 = vld [vmem:[#allocation6 + $0x150] sm:$0xff]
    %v127 = vld [vmem:[#allocation6 + $0x158] sm:$0xff]
    %v128 = vld [vmem:[#allocation6 + $0x160] sm:$0xff]
    %v129 = vld [vmem:[#allocation6 + $0x168] sm:$0xff]
    %v130 = vld [vmem:[#allocation6 + $0x170] sm:$0xff]
    %v131 = vld [vmem:[#allocation6 + $0x178] sm:$0xff]
    %v132 = vld [vmem:[#allocation6 + $0x180] sm:$0xff]
    %v133 = vld [vmem:[#allocation6 + $0x188] sm:$0xff]
    %v134 = vld [vmem:[#allocation6 + $0x190] sm:$0xff]
    %v135 = vld [vmem:[#allocation6 + $0x198] sm:$0xff]
    %v136 = vld [vmem:[#allocation6 + $0x1a0] sm:$0xff]
    %v137 = vld [vmem:[#allocation6 + $0x1a8] sm:$0xff]
    %v138 = vld [vmem:[#allocation6 + $0x1b0] sm:$0xff]
    %v139 = vld [vmem:[#allocation6 + $0x1b8] sm:$0xff]
    %v140 = vld [vmem:[#allocation6 + $0x1c0] sm:$0xff]
    %v141 = vld [vmem:[#allocation6 + $0x1c8] sm:$0xff]
    %v142 = vld [vmem:[#allocation6 + $0x1d0] sm:$0xff]
    %v143 = vld [vmem:[#allocation6 + $0x1d8] sm:$0xff]
    %v144 = vld [vmem:[#allocation6 + $0x1e0] sm:$0xff]
    %v145 = vld [vmem:[#allocation6 + $0x1e8] sm:$0xff]
    %v146 = vld [vmem:[#allocation6 + $0x1f0] sm:$0xff]
    %v147 = vld [vmem:[#allocation6 + $0x1f8] sm:$0xff]
    %v148 = vld [vmem:[#allocation6 + $0x200] sm:$0xff]
    %v149 = vld [vmem:[#allocation6 + $0x208] sm:$0xff]
    %v150 = vld [vmem:[#allocation6 + $0x210] sm:$0xff]
    %v151 = vld [vmem:[#allocation6 + $0x218] sm:$0xff]
    %v152 = vld [vmem:[#allocation6 + $0x220] sm:$0xff]
    %v153 = vld [vmem:[#allocation6 + $0x228] sm:$0xff]
    %v154 = vld [vmem:[#allocation6 + $0x230] sm:$0xff]
    %v155 = vld [vmem:[#allocation6 + $0x238] sm:$0xff]
    %v156 = vld [vmem:[#allocation6 + $0x240] sm:$0xff]
    %v157 = vld [vmem:[#allocation6 + $0x248] sm:$0xff]
    %v158 = vld [vmem:[#allocation6 + $0x250] sm:$0xff]
    %v159 = vld [vmem:[#allocation6 + $0x258] sm:$0xff]
    %v160 = vld [vmem:[#allocation6 + $0x260] sm:$0xff]
    %v161 = vld [vmem:[#allocation6 + $0x268] sm:$0xff]
    %v162 = vld [vmem:[#allocation6 + $0x270] sm:$0xff]
    %v163 = vld [vmem:[#allocation6 + $0x278] sm:$0xff]
    %v164 = vld [vmem:[#allocation6 + $0x280] sm:$0xff]
    %v165 = vld [vmem:[#allocation6 + $0x288] sm:$0xff]
    %v166 = vld [vmem:[#allocation6 + $0x290] sm:$0xff]
    %v167 = vld [vmem:[#allocation6 + $0x298] sm:$0xff]
    %v168 = vld [vmem:[#allocation6 + $0x2a0] sm:$0xff]
    %v169 = vld [vmem:[#allocation6 + $0x2a8] sm:$0xff]
    %v170 = vld [vmem:[#allocation6 + $0x2b0] sm:$0xff]
    %v171 = vld [vmem:[#allocation6 + $0x2b8] sm:$0xff]
    %v172 = vld [vmem:[#allocation6 + $0x2c0] sm:$0xff]
    %v173 = vld [vmem:[#allocation6 + $0x2c8] sm:$0xff]
    %v174 = vld [vmem:[#allocation6 + $0x2d0] sm:$0xff]
    %v175 = vld [vmem:[#allocation6 + $0x2d8] sm:$0xff]
    %v176 = vld [vmem:[#allocation6 + $0x2e0] sm:$0xff]
    %v177 = vld [vmem:[#allocation6 + $0x2e8] sm:$0xff]
    %v178 = vld [vmem:[#allocation6 + $0x2f0] sm:$0xff]
    %v179 = vld [vmem:[#allocation6 + $0x2f8] sm:$0xff]
    %v180 = vld [vmem:[#allocation6 + $0x300] sm:$0xff]
    %v181 = vld [vmem:[#allocation6 + $0x308] sm:$0xff]
    %v182 = vld [vmem:[%s2] sm:$0x3]
    %v184 = vlaneseq
    %v185 = vshrl.u32 %v184, 7
    %v186 = vsub.s32 0, %v185
    %v187 = vrot.slane %v182, %v186
    %v188 = vlaneseq
    %v189 = vshrl.u32 %v188, 7
    %v190 = vsub.s32 1, %v189
    %v191 = vrot.slane %v182, %v190
    %v292 = vunpack.c.l.b16 %v84
    %v293 = vunpack.c.h.b16 %v84
    %v294 = vunpack.c.l.b16 %v85
    %v295 = vunpack.c.h.b16 %v85
    %v296 = vunpack.c.l.b16 %v86
    %v297 = vunpack.c.h.b16 %v86
    %v298 = vunpack.c.l.b16 %v87
    %v299 = vunpack.c.h.b16 %v87
    %v300 = vunpack.c.l.b16 %v88
    %v301 = vunpack.c.h.b16 %v88
    %v302 = vunpack.c.l.b16 %v89
    %v303 = vunpack.c.h.b16 %v89
    %v304 = vunpack.c.l.b16 %v90
    %v305 = vunpack.c.h.b16 %v90
    %v306 = vunpack.c.l.b16 %v91
    %v307 = vunpack.c.h.b16 %v91
    %v308 = vunpack.c.l.b16 %v92
    %v309 = vunpack.c.h.b16 %v92
    %v310 = vunpack.c.l.b16 %v93
    %v311 = vunpack.c.h.b16 %v93
    %v312 = vunpack.c.l.b16 %v94
    %v313 = vunpack.c.h.b16 %v94
    %v314 = vunpack.c.l.b16 %v95
    %v315 = vunpack.c.h.b16 %v95
    %v316 = vunpack.c.l.b16 %v96
    %v317 = vunpack.c.h.b16 %v96
    %v318 = vunpack.c.l.b16 %v97
    %v319 = vunpack.c.h.b16 %v97
    %v320 = vunpack.c.l.b16 %v98
    %v321 = vunpack.c.h.b16 %v98
    %v322 = vunpack.c.l.b16 %v99
    %v323 = vunpack.c.h.b16 %v99
    %v324 = vunpack.c.l.b16 %v100
    %v325 = vunpack.c.h.b16 %v100
    %v326 = vunpack.c.l.b16 %v101
    %v327 = vunpack.c.h.b16 %v101
    %v328 = vunpack.c.l.b16 %v102
    %v329 = vunpack.c.h.b16 %v102
    %v330 = vunpack.c.l.b16 %v103
    %v331 = vunpack.c.h.b16 %v103
    %v332 = vunpack.c.l.b16 %v104
    %v333 = vunpack.c.h.b16 %v104
    %v334 = vunpack.c.l.b16 %v105
    %v335 = vunpack.c.h.b16 %v105
    %v336 = vunpack.c.l.b16 %v106
    %v337 = vunpack.c.h.b16 %v106
    %v338 = vunpack.c.l.b16 %v107
    %v339 = vunpack.c.h.b16 %v107
    %v340 = vunpack.c.l.b16 %v108
    %v341 = vunpack.c.h.b16 %v108
    %v342 = vunpack.c.l.b16 %v109
    %v343 = vunpack.c.h.b16 %v109
    %v344 = vunpack.c.l.b16 %v110
    %v345 = vunpack.c.h.b16 %v110
    %v346 = vunpack.c.l.b16 %v111
    %v347 = vunpack.c.h.b16 %v111
    %v348 = vunpack.c.l.b16 %v112
    %v349 = vunpack.c.h.b16 %v112
    %v350 = vunpack.c.l.b16 %v113
    %v351 = vunpack.c.h.b16 %v113
    %v352 = vunpack.c.l.b16 %v114
    %v353 = vunpack.c.h.b16 %v114
    %v354 = vunpack.c.l.b16 %v115
    %v355 = vunpack.c.h.b16 %v115
    %v356 = vunpack.c.l.b16 %v116
    %v357 = vunpack.c.h.b16 %v116
    %v358 = vunpack.c.l.b16 %v117
    %v359 = vunpack.c.h.b16 %v117
    %v360 = vunpack.c.l.b16 %v118
    %v361 = vunpack.c.h.b16 %v118
    %v362 = vunpack.c.l.b16 %v119
    %v363 = vunpack.c.h.b16 %v119
    %v364 = vunpack.c.l.b16 %v120
    %v365 = vunpack.c.h.b16 %v120
    %v366 = vunpack.c.l.b16 %v121
    %v367 = vunpack.c.h.b16 %v121
    %v368 = vunpack.c.l.b16 %v122
    %v369 = vunpack.c.h.b16 %v122
    %v370 = vunpack.c.l.b16 %v123
    %v371 = vunpack.c.h.b16 %v123
    %v372 = vunpack.c.l.b16 %v124
    %v373 = vunpack.c.h.b16 %v124
    %v374 = vunpack.c.l.b16 %v125
    %v375 = vunpack.c.h.b16 %v125
    %v376 = vunpack.c.l.b16 %v126
    %v377 = vunpack.c.h.b16 %v126
    %v378 = vunpack.c.l.b16 %v127
    %v379 = vunpack.c.h.b16 %v127
    %v380 = vunpack.c.l.b16 %v128
    %v381 = vunpack.c.h.b16 %v128
    %v382 = vunpack.c.l.b16 %v129
    %v383 = vunpack.c.h.b16 %v129
    %v384 = vunpack.c.l.b16 %v130
    %v385 = vunpack.c.h.b16 %v130
    %v386 = vunpack.c.l.b16 %v131
    %v387 = vunpack.c.h.b16 %v131
    %v388 = vunpack.c.l.b16 %v132
    %v389 = vunpack.c.h.b16 %v132
    %v390 = vunpack.c.l.b16 %v133
    %v391 = vunpack.c.h.b16 %v133
    %v392 = vunpack.c.l.b16 %v134
    %v393 = vunpack.c.h.b16 %v134
    %v394 = vunpack.c.l.b16 %v135
    %v395 = vunpack.c.h.b16 %v135
    %v396 = vunpack.c.l.b16 %v136
    %v397 = vunpack.c.h.b16 %v136
    %v398 = vunpack.c.l.b16 %v137
    %v399 = vunpack.c.h.b16 %v137
    %v400 = vunpack.c.l.b16 %v138
    %v401 = vunpack.c.h.b16 %v138
    %v402 = vunpack.c.l.b16 %v139
    %v403 = vunpack.c.h.b16 %v139
    %v404 = vunpack.c.l.b16 %v140
    %v405 = vunpack.c.h.b16 %v140
    %v406 = vunpack.c.l.b16 %v141
    %v407 = vunpack.c.h.b16 %v141
    %v408 = vunpack.c.l.b16 %v142
    %v409 = vunpack.c.h.b16 %v142
    %v410 = vunpack.c.l.b16 %v143
    %v411 = vunpack.c.h.b16 %v143
    %v412 = vunpack.c.l.b16 %v144
    %v413 = vunpack.c.h.b16 %v144
    %v414 = vunpack.c.l.b16 %v145
    %v415 = vunpack.c.h.b16 %v145
    %v416 = vunpack.c.l.b16 %v146
    %v417 = vunpack.c.h.b16 %v146
    %v418 = vunpack.c.l.b16 %v147
    %v419 = vunpack.c.h.b16 %v147
    %v420 = vunpack.c.l.b16 %v148
    %v421 = vunpack.c.h.b16 %v148
    %v422 = vunpack.c.l.b16 %v149
    %v423 = vunpack.c.h.b16 %v149
    %v424 = vunpack.c.l.b16 %v150
    %v425 = vunpack.c.h.b16 %v150
    %v426 = vunpack.c.l.b16 %v151
    %v427 = vunpack.c.h.b16 %v151
    %v428 = vunpack.c.l.b16 %v152
    %v429 = vunpack.c.h.b16 %v152
    %v430 = vunpack.c.l.b16 %v153
    %v431 = vunpack.c.h.b16 %v153
    %v432 = vunpack.c.l.b16 %v154
    %v433 = vunpack.c.h.b16 %v154
    %v434 = vunpack.c.l.b16 %v155
    %v435 = vunpack.c.h.b16 %v155
    %v436 = vunpack.c.l.b16 %v156
    %v437 = vunpack.c.h.b16 %v156
    %v438 = vunpack.c.l.b16 %v157
    %v439 = vunpack.c.h.b16 %v157
    %v440 = vunpack.c.l.b16 %v158
    %v441 = vunpack.c.h.b16 %v158
    %v442 = vunpack.c.l.b16 %v159
    %v443 = vunpack.c.h.b16 %v159
    %v444 = vunpack.c.l.b16 %v160
    %v445 = vunpack.c.h.b16 %v160
    %v446 = vunpack.c.l.b16 %v161
    %v447 = vunpack.c.h.b16 %v161
    %v448 = vunpack.c.l.b16 %v162
    %v449 = vunpack.c.h.b16 %v162
    %v450 = vunpack.c.l.b16 %v163
    %v451 = vunpack.c.h.b16 %v163
    %v452 = vunpack.c.l.b16 %v164
    %v453 = vunpack.c.h.b16 %v164
    %v454 = vunpack.c.l.b16 %v165
    %v455 = vunpack.c.h.b16 %v165
    %v456 = vunpack.c.l.b16 %v166
    %v457 = vunpack.c.h.b16 %v166
    %v458 = vunpack.c.l.b16 %v167
    %v459 = vunpack.c.h.b16 %v167
    %v460 = vunpack.c.l.b16 %v168
    %v461 = vunpack.c.h.b16 %v168
    %v462 = vunpack.c.l.b16 %v169
    %v463 = vunpack.c.h.b16 %v169
    %v464 = vunpack.c.l.b16 %v170
    %v465 = vunpack.c.h.b16 %v170
    %v466 = vunpack.c.l.b16 %v171
    %v467 = vunpack.c.h.b16 %v171
    %v468 = vunpack.c.l.b16 %v172
    %v469 = vunpack.c.h.b16 %v172
    %v470 = vunpack.c.l.b16 %v173
    %v471 = vunpack.c.h.b16 %v173
    %v472 = vunpack.c.l.b16 %v174
    %v473 = vunpack.c.h.b16 %v174
    %v474 = vunpack.c.l.b16 %v175
    %v475 = vunpack.c.h.b16 %v175
    %v476 = vunpack.c.l.b16 %v176
    %v477 = vunpack.c.h.b16 %v176
    %v478 = vunpack.c.l.b16 %v177
    %v479 = vunpack.c.h.b16 %v177
    %v480 = vunpack.c.l.b16 %v178
    %v481 = vunpack.c.h.b16 %v178
    %v482 = vunpack.c.l.b16 %v179
    %v483 = vunpack.c.h.b16 %v179
    %v484 = vunpack.c.l.b16 %v180
    %v485 = vunpack.c.h.b16 %v180
    %v486 = vunpack.c.l.b16 %v181
    %v487 = vunpack.c.h.b16 %v181
    %v488 = vpack.c.b16 %v294, %v292
    %v489 = vpack.c.b16 %v295, %v293
    %v490 = vpack.c.b16 %v298, %v296
    %v491 = vpack.c.b16 %v299, %v297
    %v492 = vpack.c.b16 %v302, %v300
    %v493 = vpack.c.b16 %v303, %v301
    %v494 = vpack.c.b16 %v306, %v304
    %v495 = vpack.c.b16 %v307, %v305
    %v496 = vpack.c.b16 %v310, %v308
    %v497 = vpack.c.b16 %v311, %v309
    %v498 = vpack.c.b16 %v314, %v312
    %v499 = vpack.c.b16 %v315, %v313
    %v500 = vpack.c.b16 %v318, %v316
    %v501 = vpack.c.b16 %v319, %v317
    %v502 = vpack.c.b16 %v322, %v320
    %v503 = vpack.c.b16 %v323, %v321
    %v504 = vpack.c.b16 %v326, %v324
    %v505 = vpack.c.b16 %v327, %v325
    %v506 = vpack.c.b16 %v330, %v328
    %v507 = vpack.c.b16 %v331, %v329
    %v508 = vpack.c.b16 %v334, %v332
    %v509 = vpack.c.b16 %v335, %v333
    %v510 = vpack.c.b16 %v338, %v336
    %v511 = vpack.c.b16 %v339, %v337
    %v512 = vpack.c.b16 %v342, %v340
    %v513 = vpack.c.b16 %v343, %v341
    %v514 = vpack.c.b16 %v346, %v344
    %v515 = vpack.c.b16 %v347, %v345
    %v516 = vpack.c.b16 %v350, %v348
    %v517 = vpack.c.b16 %v351, %v349
    %v518 = vpack.c.b16 %v354, %v352
    %v519 = vpack.c.b16 %v355, %v353
    %v520 = vpack.c.b16 %v358, %v356
    %v521 = vpack.c.b16 %v359, %v357
    %v522 = vpack.c.b16 %v362, %v360
    %v523 = vpack.c.b16 %v363, %v361
    %v524 = vpack.c.b16 %v366, %v364
    %v525 = vpack.c.b16 %v367, %v365
    %v526 = vpack.c.b16 %v370, %v368
    %v527 = vpack.c.b16 %v371, %v369
    %v528 = vpack.c.b16 %v374, %v372
    %v529 = vpack.c.b16 %v375, %v373
    %v530 = vpack.c.b16 %v378, %v376
    %v531 = vpack.c.b16 %v379, %v377
    %v532 = vpack.c.b16 %v382, %v380
    %v533 = vpack.c.b16 %v383, %v381
    %v534 = vpack.c.b16 %v386, %v384
    %v535 = vpack.c.b16 %v387, %v385
    %v536 = vpack.c.b16 %v390, %v388
    %v537 = vpack.c.b16 %v391, %v389
    %v538 = vpack.c.b16 %v394, %v392
    %v539 = vpack.c.b16 %v395, %v393
    %v540 = vpack.c.b16 %v398, %v396
    %v541 = vpack.c.b16 %v399, %v397
    %v542 = vpack.c.b16 %v402, %v400
    %v543 = vpack.c.b16 %v403, %v401
    %v544 = vpack.c.b16 %v406, %v404
    %v545 = vpack.c.b16 %v407, %v405
    %v546 = vpack.c.b16 %v410, %v408
    %v547 = vpack.c.b16 %v411, %v409
    %v548 = vpack.c.b16 %v414, %v412
    %v549 = vpack.c.b16 %v415, %v413
    %v550 = vpack.c.b16 %v418, %v416
    %v551 = vpack.c.b16 %v419, %v417
    %v552 = vpack.c.b16 %v422, %v420
    %v553 = vpack.c.b16 %v423, %v421
    %v554 = vpack.c.b16 %v426, %v424
    %v555 = vpack.c.b16 %v427, %v425
    %v556 = vpack.c.b16 %v430, %v428
    %v557 = vpack.c.b16 %v431, %v429
    %v558 = vpack.c.b16 %v434, %v432
    %v559 = vpack.c.b16 %v435, %v433
    %v560 = vpack.c.b16 %v438, %v436
    %v561 = vpack.c.b16 %v439, %v437
    %v562 = vpack.c.b16 %v442, %v440
    %v563 = vpack.c.b16 %v443, %v441
    %v564 = vpack.c.b16 %v446, %v444
    %v565 = vpack.c.b16 %v447, %v445
    %v566 = vpack.c.b16 %v450, %v448
    %v567 = vpack.c.b16 %v451, %v449
    %v568 = vpack.c.b16 %v454, %v452
    %v569 = vpack.c.b16 %v455, %v453
    %v570 = vpack.c.b16 %v458, %v456
    %v571 = vpack.c.b16 %v459, %v457
    %v572 = vpack.c.b16 %v462, %v460
    %v573 = vpack.c.b16 %v463, %v461
    %v574 = vpack.c.b16 %v466, %v464
    %v575 = vpack.c.b16 %v467, %v465
    %v576 = vpack.c.b16 %v470, %v468
    %v577 = vpack.c.b16 %v471, %v469
    %v578 = vpack.c.b16 %v474, %v472
    %v579 = vpack.c.b16 %v475, %v473
    %v580 = vpack.c.b16 %v478, %v476
    %v581 = vpack.c.b16 %v479, %v477
    %v582 = vpack.c.b16 %v482, %v480
    %v583 = vpack.c.b16 %v483, %v481
    %v584 = vpack.c.b16 %v486, %v484
    %v585 = vpack.c.b16 %v487, %v485
    %vm684 = vcmask 130048
    %v686 = vsel %vm684, %v83, 0
    %688 = vmatprep.subr.bf16.mxu0 %v489
    %689 = vmatpush1.bf16.msra.mxu0 %v488
    %690 = vmatprep.subr.bf16.mxu0 %v491
    %691 = vmatpush1.bf16.msra.mxu0 %v490
    %692 = vmatprep.subr.bf16.mxu0 %v493
    %693 = vmatpush1.bf16.msra.mxu0 %v492
    %694 = vmatprep.subr.bf16.mxu0 %v495
    %695 = vmatpush1.bf16.msra.mxu0 %v494
    %696 = vmatprep.subr.bf16.mxu0 %v497
    %697 = vmatpush1.bf16.msra.mxu0 %v496
    %698 = vmatprep.subr.bf16.mxu0 %v499
    %699 = vmatpush1.bf16.msra.mxu0 %v498
    %700 = vmatprep.subr.bf16.mxu0 %v501
    %701 = vmatpush1.bf16.msra.mxu0 %v500
    %702 = vmatprep.subr.bf16.mxu0 %v503
    %703 = vmatpush1.bf16.msra.mxu0 %v502
    %704 = vmatprep.subr.bf16.mxu0 %v505
    %705 = vmatpush1.bf16.msra.mxu0 %v504
    %706 = vmatprep.subr.bf16.mxu0 %v507
    %707 = vmatpush1.bf16.msra.mxu0 %v506
    %708 = vmatprep.subr.bf16.mxu0 %v509
    %709 = vmatpush1.bf16.msra.mxu0 %v508
    %710 = vmatprep.subr.bf16.mxu0 %v511
    %711 = vmatpush1.bf16.msra.mxu0 %v510
    %712 = vmatprep.subr.bf16.mxu0 %v513
    %713 = vmatpush1.bf16.msra.mxu0 %v512
    %714 = vmatprep.subr.bf16.mxu0 %v515
    %715 = vmatpush1.bf16.msra.mxu0 %v514
    %716 = vmatprep.subr.bf16.mxu0 %v517
    %717 = vmatpush1.bf16.msra.mxu0 %v516
    %718 = vmatprep.subr.bf16.mxu0 %v519
    %719 = vmatpush1.bf16.msra.mxu0 %v518
    %720 = vmatprep.mubr.bf16.mxu0 %v78
    %721 = vmatmul.mubr.bf16.gmra.mrb[0].mxu0 %v77
    %v722 = vpop.f32.mrb[0].mxu0
    %v723 = vadd.f32 %v187, %v722
    %v724 = vpop.f32.mrb[0].mxu0
    %v725 = vadd.f32 %v191, %v724
    %v726 = vpop.f32.mrb[0].mxu0
    %v727 = vadd.f32 %v187, %v726
    %v728 = vpop.f32.mrb[0].mxu0
    %v729 = vadd.f32 %v191, %v728
    %730 = vdwg.mxu0
    %731 = vmatprep.subr.bf16.mxu0 %v521
    %732 = vmatpush1.bf16.msra.mxu0 %v520
    %733 = vmatprep.subr.bf16.mxu0 %v523
    %734 = vmatpush1.bf16.msra.mxu0 %v522
    %735 = vmatprep.subr.bf16.mxu0 %v525
    %736 = vmatpush1.bf16.msra.mxu0 %v524
    %737 = vmatprep.subr.bf16.mxu0 %v527
    %738 = vmatpush1.bf16.msra.mxu0 %v526
    %739 = vmatprep.subr.bf16.mxu0 %v529
    %740 = vmatpush1.bf16.msra.mxu0 %v528
    %741 = vmatprep.subr.bf16.mxu0 %v531
    %742 = vmatpush1.bf16.msra.mxu0 %v530
    %743 = vmatprep.subr.bf16.mxu0 %v533
    %744 = vmatpush1.bf16.msra.mxu0 %v532
    %745 = vmatprep.subr.bf16.mxu0 %v535
    %746 = vmatpush1.bf16.msra.mxu0 %v534
    %747 = vmatprep.subr.bf16.mxu0 %v537
    %748 = vmatpush1.bf16.msra.mxu0 %v536
    %749 = vmatprep.subr.bf16.mxu0 %v539
    %750 = vmatpush1.bf16.msra.mxu0 %v538
    %751 = vmatprep.subr.bf16.mxu0 %v541
    %752 = vmatpush1.bf16.msra.mxu0 %v540
    %753 = vmatprep.subr.bf16.mxu0 %v543
    %754 = vmatpush1.bf16.msra.mxu0 %v542
    %755 = vmatprep.subr.bf16.mxu0 %v545
    %756 = vmatpush1.bf16.msra.mxu0 %v544
    %757 = vmatprep.subr.bf16.mxu0 %v547
    %758 = vmatpush1.bf16.msra.mxu0 %v546
    %759 = vmatprep.subr.bf16.mxu0 %v549
    %760 = vmatpush1.bf16.msra.mxu0 %v548
    %761 = vmatprep.subr.bf16.mxu0 %v551
    %762 = vmatpush1.bf16.msra.mxu0 %v550
    %763 = vmatprep.mubr.bf16.mxu0 %v80
    %764 = vmatmul.mubr.bf16.gmra.mrb[0].mxu0 %v79
    %v765 = vpop.f32.mrb[0].mxu0
    %v766 = vadd.f32 %v723, %v765
    %v767 = vpop.f32.mrb[0].mxu0
    %v768 = vadd.f32 %v725, %v767
    %v769 = vpop.f32.mrb[0].mxu0
    %v770 = vadd.f32 %v727, %v769
    %v771 = vpop.f32.mrb[0].mxu0
    %v772 = vadd.f32 %v729, %v771
    %773 = vdwg.mxu0
    %774 = vmatprep.subr.bf16.mxu0 %v553
    %775 = vmatpush1.bf16.msra.mxu0 %v552
    %776 = vmatprep.subr.bf16.mxu0 %v555
    %777 = vmatpush1.bf16.msra.mxu0 %v554
    %778 = vmatprep.subr.bf16.mxu0 %v557
    %779 = vmatpush1.bf16.msra.mxu0 %v556
    %780 = vmatprep.subr.bf16.mxu0 %v559
    %781 = vmatpush1.bf16.msra.mxu0 %v558
    %782 = vmatprep.subr.bf16.mxu0 %v561
    %783 = vmatpush1.bf16.msra.mxu0 %v560
    %784 = vmatprep.subr.bf16.mxu0 %v563
    %785 = vmatpush1.bf16.msra.mxu0 %v562
    %786 = vmatprep.subr.bf16.mxu0 %v565
    %787 = vmatpush1.bf16.msra.mxu0 %v564
    %788 = vmatprep.subr.bf16.mxu0 %v567
    %789 = vmatpush1.bf16.msra.mxu0 %v566
    %790 = vmatprep.subr.bf16.mxu0 %v569
    %791 = vmatpush1.bf16.msra.mxu0 %v568
    %792 = vmatprep.subr.bf16.mxu0 %v571
    %793 = vmatpush1.bf16.msra.mxu0 %v570
    %794 = vmatprep.subr.bf16.mxu0 %v573
    %795 = vmatpush1.bf16.msra.mxu0 %v572
    %796 = vmatprep.subr.bf16.mxu0 %v575
    %797 = vmatpush1.bf16.msra.mxu0 %v574
    %798 = vmatprep.subr.bf16.mxu0 %v577
    %799 = vmatpush1.bf16.msra.mxu0 %v576
    %800 = vmatprep.subr.bf16.mxu0 %v579
    %801 = vmatpush1.bf16.msra.mxu0 %v578
    %802 = vmatprep.subr.bf16.mxu0 %v581
    %803 = vmatpush1.bf16.msra.mxu0 %v580
    %804 = vmatprep.subr.bf16.mxu0 %v583
    %805 = vmatpush1.bf16.msra.mxu0 %v582
    %806 = vmatprep.mubr.bf16.mxu0 %v82
    %807 = vmatmul.mubr.bf16.gmra.mrb[0].mxu0 %v81
    %v808 = vpop.f32.mrb[0].mxu0
    %v809 = vadd.f32 %v766, %v808
    %v810 = vpop.f32.mrb[0].mxu0
    %v811 = vadd.f32 %v768, %v810
    %v812 = vpop.f32.mrb[0].mxu0
    %v813 = vadd.f32 %v770, %v812
    %v814 = vpop.f32.mrb[0].mxu0
    %v815 = vadd.f32 %v772, %v814
    %816 = vdwg.mxu0
    %817 = vmatprep.subr.bf16.mxu0 %v585
    %818 = vmatpush1.bf16.msra.mxu0 %v584
    %819 = vmatprep.subr.bf16.mxu0 0
    %820 = vmatpush1.bf16.msra.mxu0 0
    %821 = vmatprep.subr.bf16.mxu0 0
    %822 = vmatpush1.bf16.msra.mxu0 0
    %823 = vmatprep.subr.bf16.mxu0 0
    %824 = vmatpush1.bf16.msra.mxu0 0
    %825 = vmatprep.subr.bf16.mxu0 0
    %826 = vmatpush1.bf16.msra.mxu0 0
    %827 = vmatprep.subr.bf16.mxu0 0
    %828 = vmatpush1.bf16.msra.mxu0 0
    %829 = vmatprep.subr.bf16.mxu0 0
    %830 = vmatpush1.bf16.msra.mxu0 0
    %831 = vmatprep.subr.bf16.mxu0 0
    %832 = vmatpush1.bf16.msra.mxu0 0
    %833 = vmatprep.subr.bf16.mxu0 0
    %834 = vmatpush1.bf16.msra.mxu0 0
    %835 = vmatprep.subr.bf16.mxu0 0
    %836 = vmatpush1.bf16.msra.mxu0 0
    %837 = vmatprep.subr.bf16.mxu0 0
    %838 = vmatpush1.bf16.msra.mxu0 0
    %839 = vmatprep.subr.bf16.mxu0 0
    %840 = vmatpush1.bf16.msra.mxu0 0
    %841 = vmatprep.subr.bf16.mxu0 0
    %842 = vmatpush1.bf16.msra.mxu0 0
    %843 = vmatprep.subr.bf16.mxu0 0
    %844 = vmatpush1.bf16.msra.mxu0 0
    %845 = vmatprep.subr.bf16.mxu0 0
    %846 = vmatpush1.bf16.msra.mxu0 0
    %847 = vmatprep.subr.bf16.mxu0 0
    %848 = vmatpush1.bf16.msra.mxu0 0
    %849 = vmatprep.mubr.bf16.mxu0 0
    %850 = vmatmul.mubr.bf16.gmra.mrb[0].mxu0 %v686
    %v851 = vpop.f32.mrb[0].mxu0
    %v852 = vadd.f32 %v809, %v851
    %v853 = vpop.f32.mrb[0].mxu0
    %v854 = vadd.f32 %v811, %v853
    %v855 = vpop.f32.mrb[0].mxu0
    %v856 = vadd.f32 %v813, %v855
    %v857 = vpop.f32.mrb[0].mxu0
    %v858 = vadd.f32 %v815, %v857
    %859 = vdwg.mxu0
    %v860 = vmax.f32 %v852, 0.0
    %v861 = vmax.f32 %v854, 0.0
    %v862 = vmax.f32 %v856, 0.0
    %v863 = vmax.f32 %v858, 0.0
    %v864 = vpack.c.bf16 %v862, %v860
    %v865 = vpack.c.bf16 %v863, %v861
    %866 = vst [vmem:[#allocation2] sm:$0xff] %v864
    %867 = vst [vmem:[#allocation2 + $0x8] sm:$0xff] %v865
    %v868 = vld [vmem:[#allocation2] sm:$0xff]
    %v869 = vld [vmem:[#allocation2 + $0x8] sm:$0xff]
    %v870 = vld [vmem:[#allocation8] sm:$0xf]
    %v871 = vld [vmem:[#allocation8 + $0x4] sm:$0xf]
    %v872 = vld [vmem:[#allocation8 + $0x8] sm:$0xf]
    %v873 = vld [vmem:[#allocation8 + $0xc] sm:$0xf]
    %v874 = vld [vmem:[#allocation8 + $0x10] sm:$0xf]
    %v875 = vld [vmem:[#allocation8 + $0x14] sm:$0xf]
    %v876 = vld [vmem:[#allocation8 + $0x18] sm:$0xf]
    %v877 = vld [vmem:[#allocation8 + $0x1c] sm:$0xf]
    %v878 = vld [vmem:[#allocation8 + $0x20] sm:$0xf]
    %v879 = vld [vmem:[#allocation8 + $0x24] sm:$0xf]
    %v880 = vld [vmem:[#allocation8 + $0x28] sm:$0xf]
    %v881 = vld [vmem:[#allocation8 + $0x2c] sm:$0xf]
    %v882 = vld [vmem:[#allocation8 + $0x30] sm:$0xf]
    %v883 = vld [vmem:[#allocation8 + $0x34] sm:$0xf]
    %v884 = vld [vmem:[#allocation8 + $0x38] sm:$0xf]
    %v885 = vld [vmem:[#allocation8 + $0x3c] sm:$0xf]
    %v886 = vld [vmem:[#allocation8 + $0x40] sm:$0xf]
    %v887 = vld [vmem:[#allocation8 + $0x44] sm:$0xf]
    %v888 = vld [vmem:[#allocation8 + $0x48] sm:$0xf]
    %v889 = vld [vmem:[#allocation8 + $0x4c] sm:$0xf]
    %v890 = vld [vmem:[#allocation8 + $0x50] sm:$0xf]
    %v891 = vld [vmem:[#allocation8 + $0x54] sm:$0xf]
    %v892 = vld [vmem:[#allocation8 + $0x58] sm:$0xf]
    %v893 = vld [vmem:[#allocation8 + $0x5c] sm:$0xf]
    %v894 = vld [vmem:[#allocation8 + $0x60] sm:$0xf]
    %v895 = vld [vmem:[#allocation8 + $0x64] sm:$0xf]
    %v896 = vld [vmem:[#allocation8 + $0x68] sm:$0xf]
    %v897 = vld [vmem:[#allocation8 + $0x6c] sm:$0xf]
    %v898 = vld [vmem:[#allocation8 + $0x70] sm:$0xf]
    %v899 = vld [vmem:[#allocation8 + $0x74] sm:$0xf]
    %v900 = vld [vmem:[#allocation8 + $0x78] sm:$0xf]
    %v901 = vld [vmem:[#allocation8 + $0x7c] sm:$0xf]
    %v902 = vld [vmem:[%s4] sm:$0x1]
    %v904 = vlaneseq
    %v905 = vshrl.u32 %v904, 7
    %v906 = vsub.s32 0, %v905
    %v907 = vrot.slane %v902, %v906
    %v941 = vunpack.c.l.b16 %v870
    %v942 = vunpack.c.l.b16 %v871
    %v943 = vunpack.c.l.b16 %v872
    %v944 = vunpack.c.l.b16 %v873
    %v945 = vunpack.c.l.b16 %v874
    %v946 = vunpack.c.l.b16 %v875
    %v947 = vunpack.c.l.b16 %v876
    %v948 = vunpack.c.l.b16 %v877
    %v949 = vunpack.c.l.b16 %v878
    %v950 = vunpack.c.l.b16 %v879
    %v951 = vunpack.c.l.b16 %v880
    %v952 = vunpack.c.l.b16 %v881
    %v953 = vunpack.c.l.b16 %v882
    %v954 = vunpack.c.l.b16 %v883
    %v955 = vunpack.c.l.b16 %v884
    %v956 = vunpack.c.l.b16 %v885
    %v957 = vunpack.c.l.b16 %v886
    %v958 = vunpack.c.l.b16 %v887
    %v959 = vunpack.c.l.b16 %v888
    %v960 = vunpack.c.l.b16 %v889
    %v961 = vunpack.c.l.b16 %v890
    %v962 = vunpack.c.l.b16 %v891
    %v963 = vunpack.c.l.b16 %v892
    %v964 = vunpack.c.l.b16 %v893
    %v965 = vunpack.c.l.b16 %v894
    %v966 = vunpack.c.l.b16 %v895
    %v967 = vunpack.c.l.b16 %v896
    %v968 = vunpack.c.l.b16 %v897
    %v969 = vunpack.c.l.b16 %v898
    %v970 = vunpack.c.l.b16 %v899
    %v971 = vunpack.c.l.b16 %v900
    %v972 = vunpack.c.l.b16 %v901
    %v973 = vpack.c.b16 %v942, %v941
    %v974 = vpack.c.b16 %v944, %v943
    %v975 = vpack.c.b16 %v946, %v945
    %v976 = vpack.c.b16 %v948, %v947
    %v977 = vpack.c.b16 %v950, %v949
    %v978 = vpack.c.b16 %v952, %v951
    %v979 = vpack.c.b16 %v954, %v953
    %v980 = vpack.c.b16 %v956, %v955
    %v981 = vpack.c.b16 %v958, %v957
    %v982 = vpack.c.b16 %v960, %v959
    %v983 = vpack.c.b16 %v962, %v961
    %v984 = vpack.c.b16 %v964, %v963
    %v985 = vpack.c.b16 %v966, %v965
    %v986 = vpack.c.b16 %v968, %v967
    %v987 = vpack.c.b16 %v970, %v969
    %v988 = vpack.c.b16 %v972, %v971
    %1005 = vmatprep.subr.bf16.mxu0 0
    %1006 = vmatpush1.bf16.msra.mxu0 %v973
    %1007 = vmatprep.subr.bf16.mxu0 0
    %1008 = vmatpush1.bf16.msra.mxu0 %v974
    %1009 = vmatprep.subr.bf16.mxu0 0
    %1010 = vmatpush1.bf16.msra.mxu0 %v975
    %1011 = vmatprep.subr.bf16.mxu0 0
    %1012 = vmatpush1.bf16.msra.mxu0 %v976
    %1013 = vmatprep.subr.bf16.mxu0 0
    %1014 = vmatpush1.bf16.msra.mxu0 %v977
    %1015 = vmatprep.subr.bf16.mxu0 0
    %1016 = vmatpush1.bf16.msra.mxu0 %v978
    %1017 = vmatprep.subr.bf16.mxu0 0
    %1018 = vmatpush1.bf16.msra.mxu0 %v979
    %1019 = vmatprep.subr.bf16.mxu0 0
    %1020 = vmatpush1.bf16.msra.mxu0 %v980
    %1021 = vmatprep.subr.bf16.mxu0 0
    %1022 = vmatpush1.bf16.msra.mxu0 %v981
    %1023 = vmatprep.subr.bf16.mxu0 0
    %1024 = vmatpush1.bf16.msra.mxu0 %v982
    %1025 = vmatprep.subr.bf16.mxu0 0
    %1026 = vmatpush1.bf16.msra.mxu0 %v983
    %1027 = vmatprep.subr.bf16.mxu0 0
    %1028 = vmatpush1.bf16.msra.mxu0 %v984
    %1029 = vmatprep.subr.bf16.mxu0 0
    %1030 = vmatpush1.bf16.msra.mxu0 %v985
    %1031 = vmatprep.subr.bf16.mxu0 0
    %1032 = vmatpush1.bf16.msra.mxu0 %v986
    %1033 = vmatprep.subr.bf16.mxu0 0
    %1034 = vmatpush1.bf16.msra.mxu0 %v987
    %1035 = vmatprep.subr.bf16.mxu0 0
    %1036 = vmatpush1.bf16.msra.mxu0 %v988
    %1037 = vmatprep.mubr.bf16.mxu0 %v869
    %1038 = vmatmul.mubr.bf16.gmra.mrb[0].mxu0 %v868
    %v1039 = vpop.f32.mrb[0].mxu0
    %v1040 = vadd.f32 %v907, %v1039
    %v1041 = vpop.f32.mrb[0].mxu0
    %v1042 = vpop.f32.mrb[0].mxu0
    %v1043 = vadd.f32 %v907, %v1042
    %v1044 = vpop.f32.mrb[0].mxu0
    %1045 = vdwg.mxu0
    %v1046 = vpack.c.bf16 %v1043, %v1040
    %v1048 = vunpack.c.l.b16 %v1046
    %v1049 = vunpack.c.h.b16 %v1046
    %v1050 = vpack.c.b16 %v1048, %v1048
    %v1051 = vpack.c.b16 %v1049, %v1049
    %1054 = vst [vmem:[#allocation9] sm:$0xf] %v1050
    %1055 = vst [vmem:[#allocation9 + $0x4] sm:$0xf] %v1051
    // Predicated region
    $region34: #{tpu_custom_call.1} parent=1 // pred_check
      _
    $region35: #{tpu_custom_call.1} parent=1 // pred_check_branch
      %1057 = sbr.rel (0) target = $region37
    $region36: #{tpu_custom_call.1} parent=1 // pred_region
      %s1059 = ssub.s32 128, 128
      %1060 = vsyncadd [#allocation5], %s1059
      %s1061 = sshll.u32 [#allocation9], 4
      %s1062 = int_to_ptr.vmem [resolvable:$true] %s1061
      %1067 = dma.vmem_to_hbm [thread:$0]  %s1062, 128, %s5, [#allocation5], 64, 64, 4
    $region37: #{tpu_custom_call.1} parent=1 // pred_fallthru
      _
    // Predicated region
    $region38: #{tpu_custom_call.1} parent=1 // pred_check
      _
    $region39: #{tpu_custom_call.1} parent=1 // pred_check_branch
      %1069 = sbr.rel (0) target = $region41
    $region40: #{tpu_custom_call.1} parent=1 // pred_region
      %1070 = dma.done [#allocation5], 128
    $region41: #{tpu_custom_call.1} parent=1 // pred_fallthru
      _
    %1071 = vsyncpa [#allocation4], 1
    %1072 = vsyncpa [#allocation7], 1
    %1073 = vsyncpa [#allocation5], 1

</llo_original>
